<compile_context>
chip_gen: v7x
topology: tpu7x:2x2x1
jax: 0.10.0
libtpu: 0.0.40
codegen_flags: <defaults>
</compile_context>

<pallas_src>
import functools

import jax
import jax.numpy as jnp
from jax.experimental import pallas as pl
from jax.experimental.pallas import tpu as pltpu


def _gene_emb_attn_kernel(q_ref, x_ref, z_ref, a_ref, *, inv_sqrt_dim):
    # q_ref: (1, 1) scalar query parameter in SMEM
    # x_ref: (TILE_B, F) features in VMEM
    # z_ref: (TILE_B, F) attended output
    # a_ref: (TILE_B, F) normalized attention weights
    x = x_ref[...]                                   # (TILE_B, F) f32
    scale = q_ref[0, 0] * inv_sqrt_dim               # scalar: q / sqrt(d)

    w = x * scale                                    # attn logits

    # numerically-stable softmax over the feature (lane) axis -- per-row only,
    # so garbage rows of a partial edge tile stay confined to themselves.
    m = jnp.max(w, axis=-1, keepdims=True)           # (TILE_B, 1)  XLU
    e = jnp.exp(w - m)                               # (TILE_B, F)  EUP
    s = jnp.sum(e, axis=-1, keepdims=True)           # (TILE_B, 1)  XLU
    a = e / s                                        # exact divide: rows sum to 1

    a_ref[...] = a                                   # softmax
    z_ref[...] = x * a                               # x * softmax (reuses a)


def _vmem_budget_and_limit():
    """Generation-aware VMEM budget for the pipelined buffers + scoped limit."""
    default_cap = 64 * 1024 * 1024                   # v7x per-TC VMEM (smallest gen)
    try:
        cap = int(getattr(pltpu.get_tpu_info(), "vmem_capacity_bytes", default_cap))
    except Exception:
        cap = default_cap
    budget = min(cap * 3 // 8, 48 * 1024 * 1024)     # v7x: 24 MiB, v5e/v6e: 48 MiB
    limit = min(cap * 3 // 4, 96 * 1024 * 1024)      # v7x: 48 MiB, v5e/v6e: 96 MiB
    return budget, limit


def _choose_tile_b(B, F, budget_bytes):
    """Pick the batch tile so each per-stream VMEM block is ~2 MiB (HBM-roofline
    sweet spot), the 3-stream x double-buffered footprint fits the VMEM budget
    (lane-padding aware), and the grid has >=2 (ideally >=4) steps when B allows
    so the pipeline overlaps and both v7x TensorCores get batch tiles."""
    f_pad = ((F + 127) // 128) * 128                 # VMEM pads the lane dim to 128
    stream_row_bytes = f_pad * 4                     # one f32 row of one stream
    rows_target = max(8, (2 * 1024 * 1024) // stream_row_bytes)
    rows_budget = max(8, budget_bytes // (3 * 2 * stream_row_bytes))
    rows = min(rows_target, rows_budget)
    if B >= 32:
        rows = min(rows, -(-B // 4))                 # at least ~4 grid steps
    elif B >= 16:
        rows = min(rows, -(-B // 2))                 # at least 2 grid steps
    rows = max(8, (rows // 8) * 8)                   # sublane alignment
    if rows >= B:
        return B                                     # single full-height block
    return rows


def gene_emb_attention(x, queryv, input_dim, tile_b=None):
    """x: (B, 1, F) float32, queryv: (1, 1) float32. Returns (z, attn), each (B, F)."""
    B, one, F = x.shape
    assert one == 1, "expected a size-1 middle axis, as in the PyTorch module"
    x2d = x[:, 0, :]                                 # the squeeze(1)

    inv_sqrt_dim = float(input_dim) ** -0.5
    budget_bytes, vmem_limit = _vmem_budget_and_limit()
    if tile_b is None:
        tile_b = _choose_tile_b(B, F, budget_bytes)
    tile_b = min(tile_b, B)
    grid = (pl.cdiv(B, tile_b),)

    kernel = functools.partial(_gene_emb_attn_kernel, inv_sqrt_dim=inv_sqrt_dim)

    z, attn = pl.pallas_call(
        kernel,
        out_shape=(
            jax.ShapeDtypeStruct((B, F), jnp.float32),
            jax.ShapeDtypeStruct((B, F), jnp.float32),
        ),
        grid=grid,
        in_specs=[
            pl.BlockSpec((1, 1), lambda i: (0, 0), memory_space=pltpu.SMEM),
            pl.BlockSpec((tile_b, F), lambda i: (i, 0)),
        ],
        out_specs=(
            pl.BlockSpec((tile_b, F), lambda i: (i, 0)),
            pl.BlockSpec((tile_b, F), lambda i: (i, 0)),
        ),
        compiler_params=pltpu.CompilerParams(
            dimension_semantics=("parallel",),       # batch tiles are independent
            vmem_limit_bytes=int(vmem_limit),
        ),
    )(queryv, x2d)
    return z, attn


def _reference(x, queryv, input_dim):
    """Pure-JAX mirror of the PyTorch forward (same op order as the module)."""
    x2d = x[:, 0, :]
    scale = float(input_dim) ** 0.25
    w = (x2d / scale) * (queryv[0, 0] / scale)
    a = jax.nn.softmax(w, axis=1)
    return x2d * a, a


def _check(x, queryv, input_dim, tile_b=None):
    z, attn = gene_emb_attention(x, queryv, input_dim, tile_b=tile_b)
    jax.block_until_ready((z, attn))
    z_ref, attn_ref = _reference(x, queryv, input_dim)
    assert jnp.allclose(z, z_ref, atol=1e-4, rtol=1e-4), "z mismatch"
    assert jnp.allclose(attn, attn_ref, atol=1e-4, rtol=1e-4), "attn mismatch"
    assert jnp.allclose(jnp.sum(attn, axis=1), 1.0, atol=1e-4), "softmax rows must sum to 1"


if __name__ == "__main__":
    key = jax.random.PRNGKey(0)
    kq, kx1, kx2 = jax.random.split(key, 3)

    # deterministic stand-in for nn.Parameter(torch.randn((1, 1)))
    queryv = jax.random.normal(kq, (1, 1), dtype=jnp.float32)

    # Case 1: module-sized toy input (B=2, F=32), single full block.
    B1, F1 = 2, 32
    x1 = jax.random.normal(kx1, (B1, 1, F1), dtype=jnp.float32)
    _check(x1, queryv, input_dim=F1)

    # Case 2: exercise the tiled / pipelined path with a partial edge tile
    # (B=20 rows, 8-row tiles -> grid of 3, last tile padded & masked).
    B2, F2 = 20, 32
    x2 = jax.random.normal(kx2, (B2, 1, F2), dtype=jnp.float32)
    _check(x2, queryv, input_dim=F2, tile_b=8)

    print("KERNEL_OK")
</pallas_src>

<mosaic_0001>
module attributes {stable_mosaic.version = 11 : i64} {
  func.func @_gene_emb_attn_kernel(%arg0: i32, %arg1: memref<1x1xf32, #tpu.memory_space<smem>>, %arg2: memref<2x32xf32, #tpu.memory_space<vmem>>, %arg3: memref<2x32xf32, #tpu.memory_space<vmem>>, %arg4: memref<2x32xf32, #tpu.memory_space<vmem>>) attributes {dimension_semantics = [#tpu.dimension_semantics<parallel>], iteration_bounds = array<i64: 1>, scalar_prefetch = 0 : i64, scratch_operands = 0 : i64, tpu.core_type = #tpu.core_type<tc>, window_params = [{transform_indices = @transform_0, window_bounds = array<i64: 1, 1>}, {transform_indices = @transform_1, window_bounds = array<i64: 2, 32>}, {transform_indices = @transform_2, window_bounds = array<i64: 2, 32>}, {transform_indices = @transform_3, window_bounds = array<i64: 2, 32>}]} {
    %c0 = arith.constant 0 : index
    %c0_0 = arith.constant 0 : index
    %0 = vector.load %arg2[%c0, %c0_0] : memref<2x32xf32, #tpu.memory_space<vmem>>, vector<2x32xf32>
    %c0_1 = arith.constant 0 : index
    %c0_2 = arith.constant 0 : index
    %1 = memref.load %arg1[%c0_1, %c0_2] : memref<1x1xf32, #tpu.memory_space<smem>>
    %cst = arith.constant 0.176776692 : f32
    %2 = arith.mulf %1, %cst : f32
    %3 = vector.broadcast %2 : f32 to vector<2x32xf32>
    %4 = arith.mulf %0, %3 : vector<2x32xf32>
    %cst_3 = arith.constant dense<0xFF800000> : vector<2xf32>
    %5 = vector.multi_reduction <maximumf>, %4, %cst_3 [1] : vector<2x32xf32> to vector<2xf32>
    %6 = vector.shape_cast %5 : vector<2xf32> to vector<2x1xf32>
    %7 = vector.broadcast %6 : vector<2x1xf32> to vector<2x32xf32>
    %8 = arith.subf %4, %7 : vector<2x32xf32>
    %9 = math.exp %8 : vector<2x32xf32>
    %cst_4 = arith.constant dense<0.000000e+00> : vector<2xf32>
    %10 = vector.multi_reduction <add>, %9, %cst_4 [1] : vector<2x32xf32> to vector<2xf32>
    %11 = vector.shape_cast %10 : vector<2xf32> to vector<2x1xf32>
    %12 = vector.broadcast %11 : vector<2x1xf32> to vector<2x32xf32>
    %13 = arith.divf %9, %12 : vector<2x32xf32>
    %c0_5 = arith.constant 0 : index
    %c0_6 = arith.constant 0 : index
    %14 = vector.load %arg4[%c0_5, %c0_6] : memref<2x32xf32, #tpu.memory_space<vmem>>, vector<2x32xf32>
    tpu.vector_store %arg4[%c0_5, %c0_6], %13 {strides = array<i32>} : memref<2x32xf32, #tpu.memory_space<vmem>>, vector<2x32xf32>,
    %15 = arith.mulf %0, %13 : vector<2x32xf32>
    %c0_7 = arith.constant 0 : index
    %c0_8 = arith.constant 0 : index
    %16 = vector.load %arg3[%c0_7, %c0_8] : memref<2x32xf32, #tpu.memory_space<vmem>>, vector<2x32xf32>
    tpu.vector_store %arg3[%c0_7, %c0_8], %15 {strides = array<i32>} : memref<2x32xf32, #tpu.memory_space<vmem>>, vector<2x32xf32>,
    return
  }
  func.func @transform_0(%arg0: i32) -> (i32, i32) {
    %c0_i32 = arith.constant 0 : i32
    %c0_i32_0 = arith.constant 0 : i32
    %c0_i32_1 = arith.constant 0 : i32
    return %c0_i32, %c0_i32_0 : i32, i32
  }
  func.func @transform_1(%arg0: i32) -> (i32, i32) {
    %c0_i32 = arith.constant 0 : i32
    %c0_i32_0 = arith.constant 0 : i32
    return %arg0, %c0_i32 : i32, i32
  }
  func.func @transform_2(%arg0: i32) -> (i32, i32) {
    %c0_i32 = arith.constant 0 : i32
    %c0_i32_0 = arith.constant 0 : i32
    return %arg0, %c0_i32 : i32, i32
  }
  func.func @transform_3(%arg0: i32) -> (i32, i32) {
    %c0_i32 = arith.constant 0 : i32
    %c0_i32_0 = arith.constant 0 : i32
    return %arg0, %c0_i32 : i32, i32
  }
}

</mosaic_0001>

<llo_original>
// kernel: tpu_custom_call.1
$region0: #{tpu_custom_call.1}
  #allocation0 [shape = 'u32[]', space=smem, size = 0x4, offset = 0x4, fixed_abs, tag = 'smem constant byte address 0x4 - core index']
  #allocation1 [shape = 'u32[144,128]{1,0:T(1,128)}', space=vmem, size = 0x12000, scoped, tag = 'internal scratch']
  #allocation2 [shape = 'f32[1,1]{1,0:T(1,128)S(6)}', space=smem, size = 0x200, scoped, tag = 'scoped memory for tpu_custom_call.1']
  %s0 = inlined_call_operand.<no memory space> [shape: f32[1,1], index: 0, kind: input, shape index: {}]
  %s1 = inlined_call_operand.vmem [shape: f32[2,32], index: 1, kind: input, shape index: {}]
  %s2 = inlined_call_operand.hbm [shape: f32[2,32], index: 2, kind: output, shape index: {0}]
  %s3 = inlined_call_operand.hbm [shape: f32[2,32], index: 3, kind: output, shape index: {1}]
  %4 = xla_tuple %s2, %s3
  %s5 = sld [smem:[#allocation0]]
  $region26: #{tpu_custom_call.1} parent=0
    _
  %s7 = ssub.s32 1, %s5
  %s8 = scalar_select 0, %s7, %s5
  %9 = sst [smem:[#allocation2]] %s0
  $region1: #{tpu_custom_call.1} parent=0
    #allocation3 [shape = 'u8[1024]{0}', space=vmem, size = 0x400, scoped, tag = 'output window, operand 0, single buffered']
    #allocation4 [shape = 's32[1]{0}', space=sflag, size = 0x4, scoped, tag = 'scoped memory for tpu_custom_call.1']
    #allocation5 [shape = 'u8[1024]{0}', space=vmem, size = 0x400, scoped, tag = 'output window, operand 1, single buffered']
    #allocation6 [shape = 's32[1]{0}', space=sflag, size = 0x4, scoped, tag = 'scoped memory for tpu_custom_call.1']
    %10 = vsyncpa [#allocation4], 0
    %11 = vsyncpa [#allocation6], 0
    // Predicated region
    $region2: #{tpu_custom_call.1} parent=1 // pred_check
      _
    $region3: #{tpu_custom_call.1} parent=1 // pred_check_branch
      %13 = sbr.rel (0) target = $region5
    $region4: #{tpu_custom_call.1} parent=1 // pred_region
      _
    $region5: #{tpu_custom_call.1} parent=1 // pred_fallthru
      _
    // Predicated region
    $region6: #{tpu_custom_call.1} parent=1 // pred_check
      _
    $region7: #{tpu_custom_call.1} parent=1 // pred_check_branch
      %15 = sbr.rel (0) target = $region9
    $region8: #{tpu_custom_call.1} parent=1 // pred_region
      _
    $region9: #{tpu_custom_call.1} parent=1 // pred_fallthru
      _
    %v16 = vld [vmem:[%s1] sm:$0x3]
    %s17 = sld [smem:[#allocation2]]
    %s18 = smul.f32 %s17, 0.17677669
    %v19 = vstv %s18
    %v20 = vmul.f32 %v16, %v19
    %vm21 = vcmask 254976
    %v22 = vsel %vm21, %v20, -inf
    %23 = vmax.xlane.f32.xlu0 %v22
    %v24 = vpop.xlane.xlu0 %23
    %v25 = vsub.f32 %v20, %v24
    %v26 = vmul.f32 %v25, 1.442695
    %v27 = vpow.pop %v26
    %v28 = vsel %vm21, %v27, 0.0
    %29 = vadd.xlane.f32.xlu0 %v28
    %v30 = vpop.xlane.xlu0 %29
    %v31 = vrcp.pop %v30
    %v32 = vmul.f32 %v27, %v31
    %33 = vst.msk [vmem:[#allocation5] sm:$0x3] %vm21, %v32
    %v34 = vmul.f32 %v16, %v32
    %35 = vst.msk [vmem:[#allocation3] sm:$0x3] %vm21, %v34
    // Predicated region
    $region10: #{tpu_custom_call.1} parent=1 // pred_check
      _
    $region11: #{tpu_custom_call.1} parent=1 // pred_check_branch
      %37 = sbr.rel (0) target = $region13
    $region12: #{tpu_custom_call.1} parent=1 // pred_region
      %s39 = ssub.s32 32, 32
      %40 = vsyncadd [#allocation4], %s39
      %s42 = sshll.u32 [#allocation3], 4
      %s43 = int_to_ptr.vmem [resolvable:$true] %s42
      %45 = dma.vmem_to_hbm [thread:$0]  %s43, 32, %s2, [#allocation4]
    $region13: #{tpu_custom_call.1} parent=1 // pred_fallthru
      _
    // Predicated region
    $region14: #{tpu_custom_call.1} parent=1 // pred_check
      _
    $region15: #{tpu_custom_call.1} parent=1 // pred_check_branch
      %47 = sbr.rel (0) target = $region17
    $region16: #{tpu_custom_call.1} parent=1 // pred_region
      %s49 = ssub.s32 32, 32
      %50 = vsyncadd [#allocation6], %s49
      %s52 = sshll.u32 [#allocation5], 4
      %s53 = int_to_ptr.vmem [resolvable:$true] %s52
      %55 = dma.vmem_to_hbm [thread:$0]  %s53, 32, %s3, [#allocation6]
    $region17: #{tpu_custom_call.1} parent=1 // pred_fallthru
      _
    // Predicated region
    $region18: #{tpu_custom_call.1} parent=1 // pred_check
      _
    $region19: #{tpu_custom_call.1} parent=1 // pred_check_branch
      %57 = sbr.rel (0) target = $region21
    $region20: #{tpu_custom_call.1} parent=1 // pred_region
      %58 = dma.done [#allocation4], 32
    $region21: #{tpu_custom_call.1} parent=1 // pred_fallthru
      _
    // Predicated region
    $region22: #{tpu_custom_call.1} parent=1 // pred_check
      _
    $region23: #{tpu_custom_call.1} parent=1 // pred_check_branch
      %60 = sbr.rel (0) target = $region25
    $region24: #{tpu_custom_call.1} parent=1 // pred_region
      %61 = dma.done [#allocation6], 32
    $region25: #{tpu_custom_call.1} parent=1 // pred_fallthru
      _
    %62 = vsyncpa [#allocation4], 1
    %63 = vsyncpa [#allocation6], 1

</llo_original>
